<compile_context>
chip_gen: v6e
topology: v6e:2x2x1
jax: 0.10.0
libtpu: 0.0.40
codegen_flags: <defaults>
</compile_context>

<pallas_src>
import jax
import jax.numpy as jnp
from jax.experimental import pallas as pl
from jax.experimental.pallas import tpu as pltpu

NUM_HEADS = 12
HEAD_DIM = 64
HIDDEN = NUM_HEADS * HEAD_DIM  # 768


def copy_kernel(x_ref, o_ref):
    # Lane-dense pass-through copy of one (1, seq_tile, 768) tile.
    # 768 lanes -> full unmasked vector stores; the kernel is purely
    # DMA/HBM-bound.
    o_ref[...] = x_ref[...]


def m_forward(x261, x253, *, seq_tile=128):
    """x261: python tuple (B, S) (static metadata, like in the torch module).
       x253: jnp array of shape (B, S, NUM_HEADS*HEAD_DIM), row-major."""
    # x262 = operator.add(x261, (12, 64))
    x262 = tuple(x261) + (NUM_HEADS, HEAD_DIM)
    b, s = x261
    assert x253.shape == (b, s, HIDDEN)

    seq_tile = min(seq_tile, s)
    grid = (b, pl.cdiv(s, seq_tile))

    flat = pl.pallas_call(
        copy_kernel,
        out_shape=jax.ShapeDtypeStruct((b, s, HIDDEN), x253.dtype),
        grid=grid,
        in_specs=[
            pl.BlockSpec((1, seq_tile, HIDDEN), lambda bi, si: (bi, si, 0)),
        ],
        out_specs=pl.BlockSpec((1, seq_tile, HIDDEN),
                               lambda bi, si: (bi, si, 0)),
        compiler_params=pltpu.CompilerParams(
            dimension_semantics=("parallel", "parallel")),
    )(x253)

    # (B, S, 768) -> (B, S, 12, 64): metadata-only reshape on row-major data,
    # bit-identical to torch's .view().  Zero HBM traffic.
    return jnp.reshape(flat, x262)


if __name__ == "__main__":
    key = jax.random.PRNGKey(0)
    B, S = 1, 384                      # shapes implied by the module
    x261 = (B, S)
    x253 = jax.random.normal(key, (B, S, HIDDEN), dtype=jnp.float32)

    out = m_forward(x261, x253)
    out = jax.block_until_ready(out)

    # reference: pure-JAX equivalent of torch .view
    ref = jnp.reshape(x253, (B, S, NUM_HEADS, HEAD_DIM))
    assert out.shape == (B, S, NUM_HEADS, HEAD_DIM), out.shape
    assert out.dtype == x253.dtype
    assert bool(jnp.all(out == ref))

    print("KERNEL_OK")
</pallas_src>

<mosaic_0001>
module attributes {stable_mosaic.version = 11 : i64} {
  func.func @copy_kernel(%arg0: i32, %arg1: i32, %arg2: memref<1x128x768xf32, #tpu.memory_space<vmem>>, %arg3: memref<1x128x768xf32, #tpu.memory_space<vmem>>) attributes {dimension_semantics = [#tpu.dimension_semantics<parallel>, #tpu.dimension_semantics<parallel>], iteration_bounds = array<i64: 1, 3>, scalar_prefetch = 0 : i64, scratch_operands = 0 : i64, tpu.core_type = #tpu.core_type<tc>, window_params = [{transform_indices = @transform_0, window_bounds = array<i64: 1, 128, 768>}, {transform_indices = @transform_1, window_bounds = array<i64: 1, 128, 768>}]} {
    %c0 = arith.constant 0 : index
    %c0_0 = arith.constant 0 : index
    %c0_1 = arith.constant 0 : index
    %0 = vector.load %arg2[%c0, %c0_0, %c0_1] : memref<1x128x768xf32, #tpu.memory_space<vmem>>, vector<1x128x768xf32>
    %c0_2 = arith.constant 0 : index
    %c0_3 = arith.constant 0 : index
    %c0_4 = arith.constant 0 : index
    %1 = vector.load %arg3[%c0_2, %c0_3, %c0_4] : memref<1x128x768xf32, #tpu.memory_space<vmem>>, vector<1x128x768xf32>
    tpu.vector_store %arg3[%c0_2, %c0_3, %c0_4], %0 {strides = array<i32>} : memref<1x128x768xf32, #tpu.memory_space<vmem>>, vector<1x128x768xf32>,
    return
  }
  func.func @transform_0(%arg0: i32, %arg1: i32) -> (i32, i32, i32) {
    %c0_i32 = arith.constant 0 : i32
    %c0_i32_0 = arith.constant 0 : i32
    return %arg0, %arg1, %c0_i32 : i32, i32, i32
  }
  func.func @transform_1(%arg0: i32, %arg1: i32) -> (i32, i32, i32) {
    %c0_i32 = arith.constant 0 : i32
    %c0_i32_0 = arith.constant 0 : i32
    return %arg0, %arg1, %c0_i32 : i32, i32, i32
  }
}

</mosaic_0001>

<llo_original>
// kernel: tpu_custom_call.1
$region0: #{tpu_custom_call.1}
  #allocation0 [shape = 'u32[]', space=smem, size = 0x4, offset = 0x4, fixed_abs, tag = 'smem constant byte address 0x4 - core index']
  #allocation1 [shape = 'u32[144,128]{1,0:T(1,128)}', space=vmem, size = 0x12000, scoped, tag = 'internal scratch']
  %s0 = inlined_call_operand.hbm [shape: f32[1,384,768], index: 0, kind: input, shape index: {}]
  %s1 = inlined_call_operand.hbm [shape: f32[1,384,768], index: 1, kind: output, shape index: {}]
  %s2 = sld [smem:[#allocation0]]
  $region41: #{tpu_custom_call.1} parent=0
    _
  %s4 = ssub.s32 1, %s2
  %s5 = scalar_select 0, %s4, %s2
  $region1: #{tpu_custom_call.1} parent=0
    #allocation2 [shape = 'u8[786432]{0}', space=vmem, size = 0xc0000, scoped, tag = 'input window, operand 0']
    #allocation3 [shape = 's32[2]{0}', space=sflag, size = 0x8, scoped, tag = 'scoped memory for tpu_custom_call.1']
    #allocation4 [shape = 's32[2]{0}', space=sflag, size = 0x8, scoped, tag = 'scoped memory for tpu_custom_call.1']
    #allocation5 [shape = 'u8[786432]{0}', space=vmem, size = 0xc0000, scoped, tag = 'output window, operand 0']
    %6 = vsyncpa [#allocation3], 0
    %s7 = scalar_lea.sflag [#allocation3], 1
    %8 = vsyncpa %s7, 0
    %9 = vsyncpa [#allocation4], 0
    %s10 = scalar_lea.sflag [#allocation4], 1
    %11 = vsyncpa %s10, 0
    loop: start=0, step=1, limit=5
    $region2: #{tpu_custom_call.1} parent=1 // loop_pre_header
      _
    $region3: #{tpu_custom_call.1} parent=1 // loop_header
      %s13 = sphi 0, %s17
      %p14 = scmp.ge.s32.totalorder %s13, 5
      %s20 = sphi 0, %s32
      %s21 = sphi 0, %s28
      %s22 = sphi 0, %s20
      %s23 = sphi 0, %s21
      %s24 = sphi 0, %s22
      %s25 = sphi 0, %s23
      %s37 = sphi 0, %s39
      %s40 = sphi 0, %s37
      %s41 = sphi 0, %s40
      %s57 = sphi 0, %s41
      %s65 = sphi 0, %s67
      %s68 = sphi 0, %s65
      %s69 = sphi 0, %s68
      %s85 = sphi 0, %s69
    $region4: #{tpu_custom_call.1} parent=1 // loop_header_branch
      %16 = sbr.rel (%p14) target = $region8
    $region5: #{tpu_custom_call.1} parent=1 // loop_body
      %s18 = ssub.s32 %s13, 1
      %s19 = ssub.s32 %s13, 2
      %s26 = sadd.s32 1, %s21
      %p27 = scmp.ge.s32.totalorder %s26, 3
      %s28 = scalar_select %p27, 0, %s26
      %s29 = sadd.s32 1, %s20
      %s30 = scalar_select %p27, %s29, %s20
      %p31 = scmp.ge.s32.totalorder %s30, 1
      %s32 = scalar_select %p31, 0, %s30
      %s33 = ssub.s32 %s20, %s32
      %s34 = ssub.s32 %s21, %s28
      %s35 = sor.u32 %s33, %s34
      %p36 = scmp.eq.s32.totalorder %s35, 0
      %s38 = sadd.s32 %s37, 1
      %s39 = scalar_select %p36, %s37, %s38
      %p42 = pneg %p36
      %p43 = scmp.eq.s32.totalorder %s13, 2
      %p44 = por %p42, %p43
      %p45 = scmp.ne.s32.totalorder %s37, %s40
      %p46 = scmp.eq.s32.totalorder %s13, 0
      %p47 = por %p45, %p46
      %p48 = scmp.ne.s32.totalorder %s37, %s40
      %p49 = scmp.eq.s32.totalorder %s18, 2
      %p50 = por %p48, %p49
      %p51 = scmp.ne.s32.totalorder %s40, %s41
      %p52 = scmp.eq.s32.totalorder %s18, 0
      %p53 = por %p51, %p52
      %p54 = scmp.ne.s32.totalorder %s40, %s41
      %p55 = scmp.eq.s32.totalorder %s19, 2
      %p56 = por %p54, %p55
      %p58 = scmp.ne.s32.totalorder %s41, %s57
      %p59 = scmp.eq.s32.totalorder %s19, 0
      %p60 = por %p58, %p59
      %s61 = ssub.s32 %s20, %s32
      %s62 = ssub.s32 %s21, %s28
      %s63 = sor.u32 %s61, %s62
      %p64 = scmp.eq.s32.totalorder %s63, 0
      %s66 = sadd.s32 %s65, 1
      %s67 = scalar_select %p64, %s65, %s66
      %p70 = pneg %p64
      %p71 = scmp.eq.s32.totalorder %s13, 2
      %p72 = por %p70, %p71
      %p73 = scmp.ne.s32.totalorder %s65, %s68
      %p74 = scmp.eq.s32.totalorder %s13, 0
      %p75 = por %p73, %p74
      %p76 = scmp.ne.s32.totalorder %s65, %s68
      %p77 = scmp.eq.s32.totalorder %s18, 2
      %p78 = por %p76, %p77
      %p79 = scmp.ne.s32.totalorder %s68, %s69
      %p80 = scmp.eq.s32.totalorder %s18, 0
      %p81 = por %p79, %p80
      %p82 = scmp.ne.s32.totalorder %s68, %s69
      %p83 = scmp.eq.s32.totalorder %s19, 2
      %p84 = por %p82, %p83
      %p86 = scmp.ne.s32.totalorder %s69, %s85
      %p87 = scmp.eq.s32.totalorder %s19, 0
      %p88 = por %p86, %p87
      %p89 = scmp.le.s32.totalorder 1, %s13
      %p90 = scmp.lt.s32.totalorder %s13, 4
      %p91 = pnand %p89, %p90
      %p92 = pneg %p91
      // Predicated region
      $region9: #{tpu_custom_call.1} parent=5 // pred_check
        _
      $region10: #{tpu_custom_call.1} parent=5 // pred_check_branch
        %94 = sbr.rel (%p91) target = $region12
      $region11: #{tpu_custom_call.1} parent=5 // pred_region
        %s95 = ssub.s32 %s13, 1
      $region12: #{tpu_custom_call.1} parent=5 // pred_fallthru
        _
      %p96 = scmp.lt.s32.totalorder %s13, 3
      // Predicated region
      $region13: #{tpu_custom_call.1} parent=5 // pred_check
        %p97 = pneg %p96
      $region14: #{tpu_custom_call.1} parent=5 // pred_check_branch
        %99 = sbr.rel (%p97) target = $region16
      $region15: #{tpu_custom_call.1} parent=5 // pred_region
        // Predicated region
        $region17: #{tpu_custom_call.1} parent=15 // pred_check
          %p100 = pneg %p47
        $region18: #{tpu_custom_call.1} parent=15 // pred_check_branch
          %102 = sbr.rel (%p100) target = $region20
        $region19: #{tpu_custom_call.1} parent=15 // pred_region
          %s103 = sand.u32 %s37, 1
          %s104 = scalar_lea.sflag [#allocation3], %s103
          %s105 = sand.u32 %s37, 1
          %s106 = smul.addr %s105, 768
          %s107 = scalar_lea.vmem [#allocation2], %s106
          %s108 = smul.u32 16, %s21
          %s110 = ssub.s32 12288, 12288
          %111 = vsyncadd %s104, %s110
          %s112 = smul.addr %s108, 6
          %s113 = smul.addr %s20, 288
          %s114 = sadd.s32 %s112, %s113
          %s115 = smul.addr %s114, 128
          %s116 = scalar_lea.hbm %s0, %s115
          %s117 = sshll.u32 %s107, 4
          %s118 = int_to_ptr.vmem [resolvable:$true] %s117
          %123 = dma.hbm_to_vmem [thread:$0]  %s116, 12288, %s118, %s104, 768, 768, 48
        $region20: #{tpu_custom_call.1} parent=15 // pred_fallthru
          _
      $region16: #{tpu_custom_call.1} parent=5 // pred_fallthru
        _
      %p124 = scmp.le.s32.totalorder 1, %s13
      %p125 = scmp.lt.s32.totalorder %s13, 4
      %p126 = pnand %p124, %p125
      %p127 = pneg %p126
      // Predicated region
      $region21: #{tpu_custom_call.1} parent=5 // pred_check
        _
      $region22: #{tpu_custom_call.1} parent=5 // pred_check_branch
        %129 = sbr.rel (%p126) target = $region24
      $region23: #{tpu_custom_call.1} parent=5 // pred_region
        %s130 = ssub.s32 %s13, 1
        %s131 = sand.u32 %s40, 1
        %s132 = scalar_lea.sflag [#allocation3], %s131
        %s133 = sand.u32 %s40, 1
        %s134 = smul.addr %s133, 768
        %s135 = scalar_lea.vmem [#allocation2], %s134
        // Predicated region
        $region25: #{tpu_custom_call.1} parent=23 // pred_check
          %p136 = pneg %p53
        $region26: #{tpu_custom_call.1} parent=23 // pred_check_branch
          %138 = sbr.rel (%p136) target = $region28
        $region27: #{tpu_custom_call.1} parent=23 // pred_region
          %139 = dma.done %s132, 12288
        $region28: #{tpu_custom_call.1} parent=23 // pred_fallthru
          _
        %s140 = sand.u32 %s40, 1
        %s141 = scalar_lea.sflag [#allocation3], %s140
        %s142 = sand.u32 %s40, 1
        %s143 = smul.addr %s142, 768
        %s144 = scalar_lea.vmem [#allocation2], %s143
        %p145 = pneg %p53
        %p146 = pneg %p50
        %p147 = pneg %p81
        %p148 = pneg %p78
        %s149 = sand.u32 %s68, 1
        %s150 = scalar_lea.sflag [#allocation4], %s149
        %s151 = sand.u32 %s68, 1
        %s152 = smul.addr %s151, 768
        %s153 = scalar_lea.vmem [#allocation5], %s152
        %s154 = smul.u32 16, %s23
        %s155 = smul.u32 16, %s23
        %v156 = vld [vmem:[%s135] sm:$0xff]
        %v157 = vld [vmem:[%s135 + $0x8] sm:$0xff]
        %v158 = vld [vmem:[%s135 + $0x10] sm:$0xff]
        %v159 = vld [vmem:[%s135 + $0x18] sm:$0xff]
        %v160 = vld [vmem:[%s135 + $0x20] sm:$0xff]
        %v161 = vld [vmem:[%s135 + $0x28] sm:$0xff]
        %v162 = vld [vmem:[%s135 + $0x30] sm:$0xff]
        %v163 = vld [vmem:[%s135 + $0x38] sm:$0xff]
        %v164 = vld [vmem:[%s135 + $0x40] sm:$0xff]
        %v165 = vld [vmem:[%s135 + $0x48] sm:$0xff]
        %v166 = vld [vmem:[%s135 + $0x50] sm:$0xff]
        %v167 = vld [vmem:[%s135 + $0x58] sm:$0xff]
        %v168 = vld [vmem:[%s135 + $0x60] sm:$0xff]
        %v169 = vld [vmem:[%s135 + $0x68] sm:$0xff]
        %v170 = vld [vmem:[%s135 + $0x70] sm:$0xff]
        %v171 = vld [vmem:[%s135 + $0x78] sm:$0xff]
        %v172 = vld [vmem:[%s135 + $0x80] sm:$0xff]
        %v173 = vld [vmem:[%s135 + $0x88] sm:$0xff]
        %v174 = vld [vmem:[%s135 + $0x90] sm:$0xff]
        %v175 = vld [vmem:[%s135 + $0x98] sm:$0xff]
        %v176 = vld [vmem:[%s135 + $0xa0] sm:$0xff]
        %v177 = vld [vmem:[%s135 + $0xa8] sm:$0xff]
        %v178 = vld [vmem:[%s135 + $0xb0] sm:$0xff]
        %v179 = vld [vmem:[%s135 + $0xb8] sm:$0xff]
        %v180 = vld [vmem:[%s135 + $0xc0] sm:$0xff]
        %v181 = vld [vmem:[%s135 + $0xc8] sm:$0xff]
        %v182 = vld [vmem:[%s135 + $0xd0] sm:$0xff]
        %v183 = vld [vmem:[%s135 + $0xd8] sm:$0xff]
        %v184 = vld [vmem:[%s135 + $0xe0] sm:$0xff]
        %v185 = vld [vmem:[%s135 + $0xe8] sm:$0xff]
        %v186 = vld [vmem:[%s135 + $0xf0] sm:$0xff]
        %v187 = vld [vmem:[%s135 + $0xf8] sm:$0xff]
        %v188 = vld [vmem:[%s135 + $0x100] sm:$0xff]
        %v189 = vld [vmem:[%s135 + $0x108] sm:$0xff]
        %v190 = vld [vmem:[%s135 + $0x110] sm:$0xff]
        %v191 = vld [vmem:[%s135 + $0x118] sm:$0xff]
        %v192 = vld [vmem:[%s135 + $0x120] sm:$0xff]
        %v193 = vld [vmem:[%s135 + $0x128] sm:$0xff]
        %v194 = vld [vmem:[%s135 + $0x130] sm:$0xff]
        %v195 = vld [vmem:[%s135 + $0x138] sm:$0xff]
        %v196 = vld [vmem:[%s135 + $0x140] sm:$0xff]
        %v197 = vld [vmem:[%s135 + $0x148] sm:$0xff]
        %v198 = vld [vmem:[%s135 + $0x150] sm:$0xff]
        %v199 = vld [vmem:[%s135 + $0x158] sm:$0xff]
        %v200 = vld [vmem:[%s135 + $0x160] sm:$0xff]
        %v201 = vld [vmem:[%s135 + $0x168] sm:$0xff]
        %v202 = vld [vmem:[%s135 + $0x170] sm:$0xff]
        %v203 = vld [vmem:[%s135 + $0x178] sm:$0xff]
        %v204 = vld [vmem:[%s135 + $0x180] sm:$0xff]
        %v205 = vld [vmem:[%s135 + $0x188] sm:$0xff]
        %v206 = vld [vmem:[%s135 + $0x190] sm:$0xff]
        %v207 = vld [vmem:[%s135 + $0x198] sm:$0xff]
        %v208 = vld [vmem:[%s135 + $0x1a0] sm:$0xff]
        %v209 = vld [vmem:[%s135 + $0x1a8] sm:$0xff]
        %v210 = vld [vmem:[%s135 + $0x1b0] sm:$0xff]
        %v211 = vld [vmem:[%s135 + $0x1b8] sm:$0xff]
        %v212 = vld [vmem:[%s135 + $0x1c0] sm:$0xff]
        %v213 = vld [vmem:[%s135 + $0x1c8] sm:$0xff]
        %v214 = vld [vmem:[%s135 + $0x1d0] sm:$0xff]
        %v215 = vld [vmem:[%s135 + $0x1d8] sm:$0xff]
        %v216 = vld [vmem:[%s135 + $0x1e0] sm:$0xff]
        %v217 = vld [vmem:[%s135 + $0x1e8] sm:$0xff]
        %v218 = vld [vmem:[%s135 + $0x1f0] sm:$0xff]
        %v219 = vld [vmem:[%s135 + $0x1f8] sm:$0xff]
        %v220 = vld [vmem:[%s135 + $0x200] sm:$0xff]
        %v221 = vld [vmem:[%s135 + $0x208] sm:$0xff]
        %v222 = vld [vmem:[%s135 + $0x210] sm:$0xff]
        %v223 = vld [vmem:[%s135 + $0x218] sm:$0xff]
        %v224 = vld [vmem:[%s135 + $0x220] sm:$0xff]
        %v225 = vld [vmem:[%s135 + $0x228] sm:$0xff]
        %v226 = vld [vmem:[%s135 + $0x230] sm:$0xff]
        %v227 = vld [vmem:[%s135 + $0x238] sm:$0xff]
        %v228 = vld [vmem:[%s135 + $0x240] sm:$0xff]
        %v229 = vld [vmem:[%s135 + $0x248] sm:$0xff]
        %v230 = vld [vmem:[%s135 + $0x250] sm:$0xff]
        %v231 = vld [vmem:[%s135 + $0x258] sm:$0xff]
        %v232 = vld [vmem:[%s135 + $0x260] sm:$0xff]
        %v233 = vld [vmem:[%s135 + $0x268] sm:$0xff]
        %v234 = vld [vmem:[%s135 + $0x270] sm:$0xff]
        %v235 = vld [vmem:[%s135 + $0x278] sm:$0xff]
        %v236 = vld [vmem:[%s135 + $0x280] sm:$0xff]
        %v237 = vld [vmem:[%s135 + $0x288] sm:$0xff]
        %v238 = vld [vmem:[%s135 + $0x290] sm:$0xff]
        %v239 = vld [vmem:[%s135 + $0x298] sm:$0xff]
        %v240 = vld [vmem:[%s135 + $0x2a0] sm:$0xff]
        %v241 = vld [vmem:[%s135 + $0x2a8] sm:$0xff]
        %v242 = vld [vmem:[%s135 + $0x2b0] sm:$0xff]
        %v243 = vld [vmem:[%s135 + $0x2b8] sm:$0xff]
        %v244 = vld [vmem:[%s135 + $0x2c0] sm:$0xff]
        %v245 = vld [vmem:[%s135 + $0x2c8] sm:$0xff]
        %v246 = vld [vmem:[%s135 + $0x2d0] sm:$0xff]
        %v247 = vld [vmem:[%s135 + $0x2d8] sm:$0xff]
        %v248 = vld [vmem:[%s135 + $0x2e0] sm:$0xff]
        %v249 = vld [vmem:[%s135 + $0x2e8] sm:$0xff]
        %v250 = vld [vmem:[%s135 + $0x2f0] sm:$0xff]
        %v251 = vld [vmem:[%s135 + $0x2f8] sm:$0xff]
        %252 = vst [vmem:[%s153] sm:$0xff] %v156
        %253 = vst [vmem:[%s153 + $0x8] sm:$0xff] %v157
        %254 = vst [vmem:[%s153 + $0x10] sm:$0xff] %v158
        %255 = vst [vmem:[%s153 + $0x18] sm:$0xff] %v159
        %256 = vst [vmem:[%s153 + $0x20] sm:$0xff] %v160
        %257 = vst [vmem:[%s153 + $0x28] sm:$0xff] %v161
        %258 = vst [vmem:[%s153 + $0x30] sm:$0xff] %v162
        %259 = vst [vmem:[%s153 + $0x38] sm:$0xff] %v163
        %260 = vst [vmem:[%s153 + $0x40] sm:$0xff] %v164
        %261 = vst [vmem:[%s153 + $0x48] sm:$0xff] %v165
        %262 = vst [vmem:[%s153 + $0x50] sm:$0xff] %v166
        %263 = vst [vmem:[%s153 + $0x58] sm:$0xff] %v167
        %264 = vst [vmem:[%s153 + $0x60] sm:$0xff] %v168
        %265 = vst [vmem:[%s153 + $0x68] sm:$0xff] %v169
        %266 = vst [vmem:[%s153 + $0x70] sm:$0xff] %v170
        %267 = vst [vmem:[%s153 + $0x78] sm:$0xff] %v171
        %268 = vst [vmem:[%s153 + $0x80] sm:$0xff] %v172
        %269 = vst [vmem:[%s153 + $0x88] sm:$0xff] %v173
        %270 = vst [vmem:[%s153 + $0x90] sm:$0xff] %v174
        %271 = vst [vmem:[%s153 + $0x98] sm:$0xff] %v175
        %272 = vst [vmem:[%s153 + $0xa0] sm:$0xff] %v176
        %273 = vst [vmem:[%s153 + $0xa8] sm:$0xff] %v177
        %274 = vst [vmem:[%s153 + $0xb0] sm:$0xff] %v178
        %275 = vst [vmem:[%s153 + $0xb8] sm:$0xff] %v179
        %276 = vst [vmem:[%s153 + $0xc0] sm:$0xff] %v180
        %277 = vst [vmem:[%s153 + $0xc8] sm:$0xff] %v181
        %278 = vst [vmem:[%s153 + $0xd0] sm:$0xff] %v182
        %279 = vst [vmem:[%s153 + $0xd8] sm:$0xff] %v183
        %280 = vst [vmem:[%s153 + $0xe0] sm:$0xff] %v184
        %281 = vst [vmem:[%s153 + $0xe8] sm:$0xff] %v185
        %282 = vst [vmem:[%s153 + $0xf0] sm:$0xff] %v186
        %283 = vst [vmem:[%s153 + $0xf8] sm:$0xff] %v187
        %284 = vst [vmem:[%s153 + $0x100] sm:$0xff] %v188
        %285 = vst [vmem:[%s153 + $0x108] sm:$0xff] %v189
        %286 = vst [vmem:[%s153 + $0x110] sm:$0xff] %v190
        %287 = vst [vmem:[%s153 + $0x118] sm:$0xff] %v191
        %288 = vst [vmem:[%s153 + $0x120] sm:$0xff] %v192
        %289 = vst [vmem:[%s153 + $0x128] sm:$0xff] %v193
        %290 = vst [vmem:[%s153 + $0x130] sm:$0xff] %v194
        %291 = vst [vmem:[%s153 + $0x138] sm:$0xff] %v195
        %292 = vst [vmem:[%s153 + $0x140] sm:$0xff] %v196
        %293 = vst [vmem:[%s153 + $0x148] sm:$0xff] %v197
        %294 = vst [vmem:[%s153 + $0x150] sm:$0xff] %v198
        %295 = vst [vmem:[%s153 + $0x158] sm:$0xff] %v199
        %296 = vst [vmem:[%s153 + $0x160] sm:$0xff] %v200
        %297 = vst [vmem:[%s153 + $0x168] sm:$0xff] %v201
        %298 = vst [vmem:[%s153 + $0x170] sm:$0xff] %v202
        %299 = vst [vmem:[%s153 + $0x178] sm:$0xff] %v203
        %300 = vst [vmem:[%s153 + $0x180] sm:$0xff] %v204
        %301 = vst [vmem:[%s153 + $0x188] sm:$0xff] %v205
        %302 = vst [vmem:[%s153 + $0x190] sm:$0xff] %v206
        %303 = vst [vmem:[%s153 + $0x198] sm:$0xff] %v207
        %304 = vst [vmem:[%s153 + $0x1a0] sm:$0xff] %v208
        %305 = vst [vmem:[%s153 + $0x1a8] sm:$0xff] %v209
        %306 = vst [vmem:[%s153 + $0x1b0] sm:$0xff] %v210
        %307 = vst [vmem:[%s153 + $0x1b8] sm:$0xff] %v211
        %308 = vst [vmem:[%s153 + $0x1c0] sm:$0xff] %v212
        %309 = vst [vmem:[%s153 + $0x1c8] sm:$0xff] %v213
        %310 = vst [vmem:[%s153 + $0x1d0] sm:$0xff] %v214
        %311 = vst [vmem:[%s153 + $0x1d8] sm:$0xff] %v215
        %312 = vst [vmem:[%s153 + $0x1e0] sm:$0xff] %v216
        %313 = vst [vmem:[%s153 + $0x1e8] sm:$0xff] %v217
        %314 = vst [vmem:[%s153 + $0x1f0] sm:$0xff] %v218
        %315 = vst [vmem:[%s153 + $0x1f8] sm:$0xff] %v219
        %316 = vst [vmem:[%s153 + $0x200] sm:$0xff] %v220
        %317 = vst [vmem:[%s153 + $0x208] sm:$0xff] %v221
        %318 = vst [vmem:[%s153 + $0x210] sm:$0xff] %v222
        %319 = vst [vmem:[%s153 + $0x218] sm:$0xff] %v223
        %320 = vst [vmem:[%s153 + $0x220] sm:$0xff] %v224
        %321 = vst [vmem:[%s153 + $0x228] sm:$0xff] %v225
        %322 = vst [vmem:[%s153 + $0x230] sm:$0xff] %v226
        %323 = vst [vmem:[%s153 + $0x238] sm:$0xff] %v227
        %324 = vst [vmem:[%s153 + $0x240] sm:$0xff] %v228
        %325 = vst [vmem:[%s153 + $0x248] sm:$0xff] %v229
        %326 = vst [vmem:[%s153 + $0x250] sm:$0xff] %v230
        %327 = vst [vmem:[%s153 + $0x258] sm:$0xff] %v231
        %328 = vst [vmem:[%s153 + $0x260] sm:$0xff] %v232
        %329 = vst [vmem:[%s153 + $0x268] sm:$0xff] %v233
        %330 = vst [vmem:[%s153 + $0x270] sm:$0xff] %v234
        %331 = vst [vmem:[%s153 + $0x278] sm:$0xff] %v235
        %332 = vst [vmem:[%s153 + $0x280] sm:$0xff] %v236
        %333 = vst [vmem:[%s153 + $0x288] sm:$0xff] %v237
        %334 = vst [vmem:[%s153 + $0x290] sm:$0xff] %v238
        %335 = vst [vmem:[%s153 + $0x298] sm:$0xff] %v239
        %336 = vst [vmem:[%s153 + $0x2a0] sm:$0xff] %v240
        %337 = vst [vmem:[%s153 + $0x2a8] sm:$0xff] %v241
        %338 = vst [vmem:[%s153 + $0x2b0] sm:$0xff] %v242
        %339 = vst [vmem:[%s153 + $0x2b8] sm:$0xff] %v243
        %340 = vst [vmem:[%s153 + $0x2c0] sm:$0xff] %v244
        %341 = vst [vmem:[%s153 + $0x2c8] sm:$0xff] %v245
        %342 = vst [vmem:[%s153 + $0x2d0] sm:$0xff] %v246
        %343 = vst [vmem:[%s153 + $0x2d8] sm:$0xff] %v247
        %344 = vst [vmem:[%s153 + $0x2e0] sm:$0xff] %v248
        %345 = vst [vmem:[%s153 + $0x2e8] sm:$0xff] %v249
        %346 = vst [vmem:[%s153 + $0x2f0] sm:$0xff] %v250
        %347 = vst [vmem:[%s153 + $0x2f8] sm:$0xff] %v251
        %s348 = sand.u32 %s68, 1
        %s349 = scalar_lea.sflag [#allocation4], %s348
        %s350 = sand.u32 %s68, 1
        %s351 = smul.addr %s350, 768
        %s352 = scalar_lea.vmem [#allocation5], %s351
        // Predicated region
        $region29: #{tpu_custom_call.1} parent=23 // pred_check
          %p353 = pneg %p78
        $region30: #{tpu_custom_call.1} parent=23 // pred_check_branch
          %355 = sbr.rel (%p353) target = $region32
        $region31: #{tpu_custom_call.1} parent=23 // pred_region
          %s356 = smul.u32 16, %s23
          %s358 = ssub.s32 12288, 12288
          %359 = vsyncadd %s349, %s358
          %s360 = smul.addr %s356, 6
          %s361 = smul.addr %s22, 288
          %s362 = sadd.s32 %s360, %s361
          %s363 = smul.addr %s362, 128
          %s364 = scalar_lea.hbm %s1, %s363
          %s365 = sshll.u32 %s352, 4
          %s366 = int_to_ptr.vmem [resolvable:$true] %s365
          %371 = dma.vmem_to_hbm [thread:$0]  %s366, 12288, %s364, %s349, 768, 768, 48
        $region32: #{tpu_custom_call.1} parent=23 // pred_fallthru
          _
      $region24: #{tpu_custom_call.1} parent=5 // pred_fallthru
        _
      %p372 = scmp.le.s32.totalorder 2, %s13
      // Predicated region
      $region33: #{tpu_custom_call.1} parent=5 // pred_check
        %p373 = pneg %p372
      $region34: #{tpu_custom_call.1} parent=5 // pred_check_branch
        %375 = sbr.rel (%p373) target = $region36
      $region35: #{tpu_custom_call.1} parent=5 // pred_region
        %s376 = ssub.s32 %s13, 2
        // Predicated region
        $region37: #{tpu_custom_call.1} parent=35 // pred_check
          %p377 = pneg %p84
        $region38: #{tpu_custom_call.1} parent=35 // pred_check_branch
          %379 = sbr.rel (%p377) target = $region40
        $region39: #{tpu_custom_call.1} parent=35 // pred_region
          %s380 = sand.u32 %s69, 1
          %s381 = scalar_lea.sflag [#allocation4], %s380
          %s382 = sand.u32 %s69, 1
          %s383 = smul.addr %s382, 768
          %s384 = scalar_lea.vmem [#allocation5], %s383
          %385 = dma.done %s381, 12288
        $region40: #{tpu_custom_call.1} parent=35 // pred_fallthru
          _
      $region36: #{tpu_custom_call.1} parent=5 // pred_fallthru
        _
    $region6: #{tpu_custom_call.1} parent=1 // loop_footer
      %s17 = sadd.s32 1, %s13
    $region7: #{tpu_custom_call.1} parent=1 // loop_footer_branch
      %12 = sbr.rel target = $region3
    $region8: #{tpu_custom_call.1} parent=1 // loop_exit
      _
    %386 = vsyncpa [#allocation3], 1
    %s387 = scalar_lea.sflag [#allocation3], 1
    %388 = vsyncpa %s387, 1
    %389 = vsyncpa [#allocation4], 1
    %s390 = scalar_lea.sflag [#allocation4], 1
    %391 = vsyncpa %s390, 1

</llo_original>
